<compile_context>
chip_gen: v7x
topology: tpu7x:2x2x1
jax: 0.10.0
libtpu: 0.0.40
codegen_flags: <defaults>
</compile_context>

<pallas_src>
import functools
import math

import jax
import jax.numpy as jnp
from jax.experimental import pallas as pl
from jax.experimental.pallas import tpu as pltpu


def _round_up(x: int, m: int) -> int:
    return ((x + m - 1) // m) * m


def _cdiv(a: int, b: int) -> int:
    return (a + b - 1) // b


def _choose_lane_pack(fin: int, fout: int, max_pack: int) -> int:
    """Pick R so R*fout (and ideally R*fin) are multiples of 128 lanes."""
    r = 128 // math.gcd(fout, 128)          # smallest R making stores lane-dense
    if r > max_pack:
        return 1                            # perf cliff (masked stores), but legal
    mult = 128 // math.gcd(r * fin, 128)    # extra factor for lane-dense loads
    packed_w_bytes = (r * mult * fin) * (r * mult * fout) * 4
    if r * mult <= max_pack and packed_w_bytes <= (4 << 20):
        r *= mult
    return r


def _bucket_rows(n: int, row_align: int) -> int:
    """Round n up to a bucket (<=12.5% slack) to bound compiled shape variants."""
    n = max(n, 1)
    p2 = 1
    while p2 < n:
        p2 *= 2
    gran = max(row_align, p2 // 8)
    return _round_up(n, gran)


def _linear_kernel(x_ref, w_ref, b_ref, o_ref):
    """o = x @ w + b for one row tile.

    x: [slab_tile, R*Fin]   row tile of lane-packed inputs (double-buffered)
    w: [R*Fin, R*Fout]      block-diagonal packed weight (VMEM resident)
    b: [1, R*Fout]          tiled bias (VMEM resident)
    o: [slab_tile, R*Fout]  lane-dense output tile
    """
    y = jnp.dot(x_ref[...], w_ref[...], preferred_element_type=jnp.float32)
    o_ref[...] = (y + b_ref[...]).astype(o_ref.dtype)


@functools.partial(
    jax.jit,
    static_argnames=("r", "fin", "fout", "slab_tile", "out_dtype"))
def _planar_linear_pallas(x_pad, w_packed, b_packed, *, r, fin, fout,
                          slab_tile, out_dtype):
    """Apply the planar Linear to a padded [N_pad, Fin] array (N_pad % (8*r) == 0)."""
    n_pad = x_pad.shape[0]
    n_slab = n_pad // r
    x_p = x_pad.reshape(n_slab, r * fin)     # free row-major reshape
    grid = (_cdiv(n_slab, slab_tile),)       # ragged last block OK (masked stores)

    in_blk = slab_tile * r * fin * x_pad.dtype.itemsize
    out_blk = slab_tile * r * fout * jnp.dtype(out_dtype).itemsize
    w_bytes = w_packed.size * w_packed.dtype.itemsize
    vmem = 2 * (in_blk + out_blk) + w_bytes + (2 << 20)     # dbl-buffer + margin
    vmem = int(min(max(vmem, 16 << 20), 48 << 20))          # safe on v5e..v7x

    y_p = pl.pallas_call(
        _linear_kernel,
        out_shape=jax.ShapeDtypeStruct((n_slab, r * fout), out_dtype),
        grid=grid,
        in_specs=[
            pl.BlockSpec((slab_tile, r * fin), lambda i: (i, 0)),
            pl.BlockSpec((r * fin, r * fout), lambda i: (0, 0)),   # resident
            pl.BlockSpec((1, r * fout), lambda i: (0, 0)),         # resident
        ],
        out_specs=pl.BlockSpec((slab_tile, r * fout), lambda i: (i, 0)),
        compiler_params=pltpu.CompilerParams(
            dimension_semantics=("parallel",),
            vmem_limit_bytes=vmem),
    )(x_p, w_packed, b_packed)
    return y_p.reshape(n_pad, fout)


class Encoder:
    """JAX/Pallas port of the nugraph3 Encoder.

    Parameters are initialized like PyTorch nn.Linear defaults
    (uniform +/- 1/sqrt(fan_in)).  Weight is stored pre-transposed as
    [in_features, planar_features] so the kernel computes x @ W + b.
    """

    def __init__(self, in_features: int, planar_features: int,
                 nexus_features: int, interaction_features: int,
                 planes: tuple, key: jax.Array, *,
                 tile_rows: int | None = None,
                 max_lane_pack: int | None = None,
                 min_pallas_rows: int = 1024,
                 out_dtype=jnp.float32):
        kw, kb = jax.random.split(key)
        bound = 1.0 / (in_features ** 0.5)
        self.w = jax.random.uniform(
            kw, (in_features, planar_features), jnp.float32, -bound, bound)
        self.b = jax.random.uniform(
            kb, (planar_features,), jnp.float32, -bound, bound)
        self.in_features = in_features
        self.planar_features = planar_features
        self.nexus_features = nexus_features
        self.interaction_features = interaction_features
        self.planes = tuple(planes)
        self.min_pallas_rows = min_pallas_rows
        self.out_dtype = out_dtype

        # Generation-specific defaults.
        kind = ""
        try:
            kind = jax.devices()[0].device_kind.lower()
        except Exception:
            pass
        is_v5e = ("v5e" in kind) or ("v5 lite" in kind) or ("v5lite" in kind)
        if tile_rows is None:
            tile_rows = 16384 if is_v5e else 32768
        if max_lane_pack is None:
            max_lane_pack = 8 if is_v5e else 32   # keep kron FLOPs off v5e MXU roof
        self.tile_rows = tile_rows

        self.lane_pack = _choose_lane_pack(
            in_features, planar_features, max_lane_pack)
        r = self.lane_pack
        # Block-diagonal packed weight & tiled bias (built once, reused).
        self.w_packed = jnp.kron(jnp.eye(r, dtype=self.w.dtype), self.w)
        self.b_packed = jnp.tile(self.b, r).reshape(1, r * planar_features)

    def _slab_tile(self, n_pad: int) -> int:
        r = self.lane_pack
        n_slab = n_pad // r                      # multiple of 8 by construction
        desired = max(8, self.tile_rows // r)
        # Keep >= 8 grid steps when possible so the "parallel" axis can shard
        # across both v7x TensorCores and the pipeline stays filled.
        cap = max(8, _round_up(_cdiv(n_slab, 8), 8))
        return _round_up(min(desired, cap, n_slab), 8)

    def __call__(self, data: dict) -> dict:
        fin, fout = self.in_features, self.planar_features
        out = {}
        for p in self.planes:
            x = data[p]["x"]
            n = int(x.shape[0])
            if n == 0:
                out[p] = {"x": jnp.zeros((0, fout), self.out_dtype)}
                continue
            if n < self.min_pallas_rows:
                # Tiny-graph fallback: XLA GEMV beats kernel launch overhead.
                out[p] = {"x": (x @ self.w + self.b).astype(self.out_dtype)}
                continue
            r = self.lane_pack
            row_align = 8 * r
            n_pad = _bucket_rows(n, row_align)
            if n_pad != n:
                x = jnp.concatenate(
                    [x, jnp.zeros((n_pad - n, fin), x.dtype)], axis=0)
            y = _planar_linear_pallas(
                x, self.w_packed, self.b_packed,
                r=r, fin=fin, fout=fout,
                slab_tile=self._slab_tile(n_pad),
                out_dtype=self.out_dtype)
            out[p] = {"x": y[:n] if n_pad != n else y}
        # TODO(synk): plain zero-filled tensors, no kernel needed.
        out["sp"] = {"x": jnp.zeros(
            (int(data["sp"]["num_nodes"]), self.nexus_features), jnp.float32)}
        out["evt"] = {"x": jnp.zeros(
            (int(data["evt"]["num_nodes"]), self.interaction_features),
            jnp.float32)}
        return out


if __name__ == "__main__":
    key = jax.random.PRNGKey(0)
    k_params, ku, kv, ky = jax.random.split(key, 4)

    planes = ("u", "v", "y")
    in_features = 4
    planar_features = 32
    nexus_features = 32
    interaction_features = 32

    # Heterogeneous graph: per-plane hit node features + sp/evt node counts.
    data = {
        "u": {"x": jax.random.normal(ku, (16, in_features), jnp.float32)},
        "v": {"x": jax.random.normal(kv, (24, in_features), jnp.float32)},
        "y": {"x": jax.random.normal(ky, (32, in_features), jnp.float32)},
        "sp": {"num_nodes": 8},
        "evt": {"num_nodes": 2},
    }

    # min_pallas_rows=0 forces the Pallas path even at demo-scale graphs.
    encoder = Encoder(in_features, planar_features, nexus_features,
                      interaction_features, planes, k_params,
                      min_pallas_rows=0)

    out = encoder(data)
    for p in planes:
        jax.block_until_ready(out[p]["x"])
    jax.block_until_ready(out["sp"]["x"])
    jax.block_until_ready(out["evt"]["x"])

    # Correctness check against a plain-JAX reference of the Linear layer.
    for p in planes:
        ref = data[p]["x"] @ encoder.w + encoder.b
        assert out[p]["x"].shape == ref.shape, p
        assert jnp.allclose(out[p]["x"], ref, atol=2e-5, rtol=2e-5), p
    assert out["sp"]["x"].shape == (8, nexus_features)
    assert out["evt"]["x"].shape == (2, interaction_features)
    assert jnp.all(out["sp"]["x"] == 0.0)
    assert jnp.all(out["evt"]["x"] == 0.0)

    print("KERNEL_OK")
</pallas_src>

<mosaic_0001>
module attributes {stable_mosaic.version = 11 : i64} {
  func.func @_linear_kernel(%arg0: i32, %arg1: memref<8x128xf32, #tpu.memory_space<vmem>>, %arg2: memref<128x1024xf32, #tpu.memory_space<vmem>>, %arg3: memref<1x1024xf32, #tpu.memory_space<vmem>>, %arg4: memref<8x1024xf32, #tpu.memory_space<vmem>>) attributes {dimension_semantics = [#tpu.dimension_semantics<parallel>], iteration_bounds = array<i64: 1>, scalar_prefetch = 0 : i64, scratch_operands = 0 : i64, tpu.core_type = #tpu.core_type<tc>, window_params = [{transform_indices = @transform_0, window_bounds = array<i64: 8, 128>}, {pipeline_mode = #tpu.pipeline_mode<synchronous>, transform_indices = @transform_1, window_bounds = array<i64: 128, 1024>}, {pipeline_mode = #tpu.pipeline_mode<synchronous>, transform_indices = @transform_2, window_bounds = array<i64: 1, 1024>}, {transform_indices = @transform_3, window_bounds = array<i64: 8, 1024>}]} {
    %c0 = arith.constant 0 : index
    %c0_0 = arith.constant 0 : index
    %0 = vector.load %arg1[%c0, %c0_0] : memref<8x128xf32, #tpu.memory_space<vmem>>, vector<8x128xf32>
    %c0_1 = arith.constant 0 : index
    %c0_2 = arith.constant 0 : index
    %1 = vector.load %arg2[%c0_1, %c0_2] : memref<128x1024xf32, #tpu.memory_space<vmem>>, vector<128x1024xf32>
    %cst = arith.constant dense<0.000000e+00> : vector<8x1024xf32>
    %2 = tpu.matmul %0, %1, %cst {dimension_numbers = #tpu.dot_dimension_numbers<[1], [0], [0], [1], [0, 0, 1, 1], [], []>} : vector<8x128xf32>, vector<128x1024xf32>, vector<8x1024xf32> -> vector<8x1024xf32>
    %c0_3 = arith.constant 0 : index
    %c0_4 = arith.constant 0 : index
    %3 = vector.load %arg3[%c0_3, %c0_4] : memref<1x1024xf32, #tpu.memory_space<vmem>>, vector<1x1024xf32>
    %4 = vector.broadcast %3 : vector<1x1024xf32> to vector<8x1024xf32>
    %5 = arith.addf %2, %4 : vector<8x1024xf32>
    %c0_5 = arith.constant 0 : index
    %c0_6 = arith.constant 0 : index
    %6 = vector.load %arg4[%c0_5, %c0_6] : memref<8x1024xf32, #tpu.memory_space<vmem>>, vector<8x1024xf32>
    tpu.vector_store %arg4[%c0_5, %c0_6], %5 {strides = array<i32>} : memref<8x1024xf32, #tpu.memory_space<vmem>>, vector<8x1024xf32>,
    return
  }
  func.func @transform_0(%arg0: i32) -> (i32, i32) {
    %c0_i32 = arith.constant 0 : i32
    %c0_i32_0 = arith.constant 0 : i32
    return %arg0, %c0_i32 : i32, i32
  }
  func.func @transform_1(%arg0: i32) -> (i32, i32) {
    %c0_i32 = arith.constant 0 : i32
    %c0_i32_0 = arith.constant 0 : i32
    %c0_i32_1 = arith.constant 0 : i32
    return %c0_i32, %c0_i32_0 : i32, i32
  }
  func.func @transform_2(%arg0: i32) -> (i32, i32) {
    %c0_i32 = arith.constant 0 : i32
    %c0_i32_0 = arith.constant 0 : i32
    %c0_i32_1 = arith.constant 0 : i32
    return %c0_i32, %c0_i32_0 : i32, i32
  }
  func.func @transform_3(%arg0: i32) -> (i32, i32) {
    %c0_i32 = arith.constant 0 : i32
    %c0_i32_0 = arith.constant 0 : i32
    return %arg0, %c0_i32 : i32, i32
  }
}

</mosaic_0001>

<llo_original>
// kernel: _planar_linear_pallas.1
$region0: #{_planar_linear_pallas.1}
  #allocation0 [shape = 'u32[]', space=smem, size = 0x4, offset = 0x4, fixed_abs, tag = 'smem constant byte address 0x4 - core index']
  #allocation1 [shape = 'u32[144,128]{1,0:T(1,128)}', space=vmem, size = 0x12000, scoped, tag = 'internal scratch']
  %s0 = inlined_call_operand.vmem [shape: f32[8,128], index: 0, kind: input, shape index: {}]
  %s1 = inlined_call_operand.hbm [shape: f32[128,1024], index: 1, kind: input, shape index: {}]
  %s2 = inlined_call_operand.vmem [shape: f32[1,1024], index: 2, kind: input, shape index: {}]
  %s3 = inlined_call_operand.vmem [shape: f32[8,1024], index: 3, kind: output, shape index: {}]
  %s4 = sld [smem:[#allocation0]]
  $region26: #{_planar_linear_pallas.1} parent=0
    _
  %s6 = ssub.s32 1, %s4
  %s7 = scalar_select 0, %s6, %s4
  $region1: #{_planar_linear_pallas.1} parent=0
    #allocation2 [shape = 'u8[524288]{0}', space=vmem, size = 0x80000, scoped, tag = 'input window, operand 1, single buffered']
    #allocation3 [shape = 's32[1]{0}', space=sflag, size = 0x4, scoped, tag = 'scoped memory for _planar_linear_pallas.1']
    %8 = vsyncpa [#allocation3], 0
    // Predicated region
    $region2: #{_planar_linear_pallas.1} parent=1 // pred_check
      _
    $region3: #{_planar_linear_pallas.1} parent=1 // pred_check_branch
      %10 = sbr.rel (0) target = $region5
    $region4: #{_planar_linear_pallas.1} parent=1 // pred_region
      _
    $region5: #{_planar_linear_pallas.1} parent=1 // pred_fallthru
      _
    // Predicated region
    $region6: #{_planar_linear_pallas.1} parent=1 // pred_check
      _
    $region7: #{_planar_linear_pallas.1} parent=1 // pred_check_branch
      %12 = sbr.rel (0) target = $region9
    $region8: #{_planar_linear_pallas.1} parent=1 // pred_region
      %s14 = ssub.s32 16384, 16384
      %15 = vsyncadd [#allocation3], %s14
      %s16 = sshll.u32 [#allocation2], 4
      %s17 = int_to_ptr.vmem [resolvable:$true] %s16
      %22 = dma.hbm_to_vmem [thread:$0]  %s1, 16384, %s17, [#allocation3], 1024, 1024, 64
    $region9: #{_planar_linear_pallas.1} parent=1 // pred_fallthru
      _
    // Predicated region
    $region10: #{_planar_linear_pallas.1} parent=1 // pred_check
      _
    $region11: #{_planar_linear_pallas.1} parent=1 // pred_check_branch
      %24 = sbr.rel (0) target = $region13
    $region12: #{_planar_linear_pallas.1} parent=1 // pred_region
      _
    $region13: #{_planar_linear_pallas.1} parent=1 // pred_fallthru
      _
    // Predicated region
    $region14: #{_planar_linear_pallas.1} parent=1 // pred_check
      _
    $region15: #{_planar_linear_pallas.1} parent=1 // pred_check_branch
      %26 = sbr.rel (0) target = $region17
    $region16: #{_planar_linear_pallas.1} parent=1 // pred_region
      %27 = dma.done [#allocation3], 16384
    $region17: #{_planar_linear_pallas.1} parent=1 // pred_fallthru
      _
    %v28 = vld [vmem:[%s0] sm:$0xff]
    %v29 = vld [vmem:[#allocation2] sm:$0xff]
    %v30 = vld [vmem:[#allocation2 + $0x8] sm:$0xff]
    %v31 = vld [vmem:[#allocation2 + $0x10] sm:$0xff]
    %v32 = vld [vmem:[#allocation2 + $0x18] sm:$0xff]
    %v33 = vld [vmem:[#allocation2 + $0x20] sm:$0xff]
    %v34 = vld [vmem:[#allocation2 + $0x28] sm:$0xff]
    %v35 = vld [vmem:[#allocation2 + $0x30] sm:$0xff]
    %v36 = vld [vmem:[#allocation2 + $0x38] sm:$0xff]
    %v37 = vld [vmem:[#allocation2 + $0x40] sm:$0xff]
    %v38 = vld [vmem:[#allocation2 + $0x48] sm:$0xff]
    %v39 = vld [vmem:[#allocation2 + $0x50] sm:$0xff]
    %v40 = vld [vmem:[#allocation2 + $0x58] sm:$0xff]
    %v41 = vld [vmem:[#allocation2 + $0x60] sm:$0xff]
    %v42 = vld [vmem:[#allocation2 + $0x68] sm:$0xff]
    %v43 = vld [vmem:[#allocation2 + $0x70] sm:$0xff]
    %v44 = vld [vmem:[#allocation2 + $0x78] sm:$0xff]
    %v45 = vld [vmem:[#allocation2 + $0x80] sm:$0xff]
    %v46 = vld [vmem:[#allocation2 + $0x88] sm:$0xff]
    %v47 = vld [vmem:[#allocation2 + $0x90] sm:$0xff]
    %v48 = vld [vmem:[#allocation2 + $0x98] sm:$0xff]
    %v49 = vld [vmem:[#allocation2 + $0xa0] sm:$0xff]
    %v50 = vld [vmem:[#allocation2 + $0xa8] sm:$0xff]
    %v51 = vld [vmem:[#allocation2 + $0xb0] sm:$0xff]
    %v52 = vld [vmem:[#allocation2 + $0xb8] sm:$0xff]
    %v53 = vld [vmem:[#allocation2 + $0xc0] sm:$0xff]
    %v54 = vld [vmem:[#allocation2 + $0xc8] sm:$0xff]
    %v55 = vld [vmem:[#allocation2 + $0xd0] sm:$0xff]
    %v56 = vld [vmem:[#allocation2 + $0xd8] sm:$0xff]
    %v57 = vld [vmem:[#allocation2 + $0xe0] sm:$0xff]
    %v58 = vld [vmem:[#allocation2 + $0xe8] sm:$0xff]
    %v59 = vld [vmem:[#allocation2 + $0xf0] sm:$0xff]
    %v60 = vld [vmem:[#allocation2 + $0xf8] sm:$0xff]
    %v61 = vld [vmem:[#allocation2 + $0x100] sm:$0xff]
    %v62 = vld [vmem:[#allocation2 + $0x108] sm:$0xff]
    %v63 = vld [vmem:[#allocation2 + $0x110] sm:$0xff]
    %v64 = vld [vmem:[#allocation2 + $0x118] sm:$0xff]
    %v65 = vld [vmem:[#allocation2 + $0x120] sm:$0xff]
    %v66 = vld [vmem:[#allocation2 + $0x128] sm:$0xff]
    %v67 = vld [vmem:[#allocation2 + $0x130] sm:$0xff]
    %v68 = vld [vmem:[#allocation2 + $0x138] sm:$0xff]
    %v69 = vld [vmem:[#allocation2 + $0x140] sm:$0xff]
    %v70 = vld [vmem:[#allocation2 + $0x148] sm:$0xff]
    %v71 = vld [vmem:[#allocation2 + $0x150] sm:$0xff]
    %v72 = vld [vmem:[#allocation2 + $0x158] sm:$0xff]
    %v73 = vld [vmem:[#allocation2 + $0x160] sm:$0xff]
    %v74 = vld [vmem:[#allocation2 + $0x168] sm:$0xff]
    %v75 = vld [vmem:[#allocation2 + $0x170] sm:$0xff]
    %v76 = vld [vmem:[#allocation2 + $0x178] sm:$0xff]
    %v77 = vld [vmem:[#allocation2 + $0x180] sm:$0xff]
    %v78 = vld [vmem:[#allocation2 + $0x188] sm:$0xff]
    %v79 = vld [vmem:[#allocation2 + $0x190] sm:$0xff]
    %v80 = vld [vmem:[#allocation2 + $0x198] sm:$0xff]
    %v81 = vld [vmem:[#allocation2 + $0x1a0] sm:$0xff]
    %v82 = vld [vmem:[#allocation2 + $0x1a8] sm:$0xff]
    %v83 = vld [vmem:[#allocation2 + $0x1b0] sm:$0xff]
    %v84 = vld [vmem:[#allocation2 + $0x1b8] sm:$0xff]
    %v85 = vld [vmem:[#allocation2 + $0x1c0] sm:$0xff]
    %v86 = vld [vmem:[#allocation2 + $0x1c8] sm:$0xff]
    %v87 = vld [vmem:[#allocation2 + $0x1d0] sm:$0xff]
    %v88 = vld [vmem:[#allocation2 + $0x1d8] sm:$0xff]
    %v89 = vld [vmem:[#allocation2 + $0x1e0] sm:$0xff]
    %v90 = vld [vmem:[#allocation2 + $0x1e8] sm:$0xff]
    %v91 = vld [vmem:[#allocation2 + $0x1f0] sm:$0xff]
    %v92 = vld [vmem:[#allocation2 + $0x1f8] sm:$0xff]
    %v93 = vld [vmem:[#allocation2 + $0x200] sm:$0xff]
    %v94 = vld [vmem:[#allocation2 + $0x208] sm:$0xff]
    %v95 = vld [vmem:[#allocation2 + $0x210] sm:$0xff]
    %v96 = vld [vmem:[#allocation2 + $0x218] sm:$0xff]
    %v97 = vld [vmem:[#allocation2 + $0x220] sm:$0xff]
    %v98 = vld [vmem:[#allocation2 + $0x228] sm:$0xff]
    %v99 = vld [vmem:[#allocation2 + $0x230] sm:$0xff]
    %v100 = vld [vmem:[#allocation2 + $0x238] sm:$0xff]
    %v101 = vld [vmem:[#allocation2 + $0x240] sm:$0xff]
    %v102 = vld [vmem:[#allocation2 + $0x248] sm:$0xff]
    %v103 = vld [vmem:[#allocation2 + $0x250] sm:$0xff]
    %v104 = vld [vmem:[#allocation2 + $0x258] sm:$0xff]
    %v105 = vld [vmem:[#allocation2 + $0x260] sm:$0xff]
    %v106 = vld [vmem:[#allocation2 + $0x268] sm:$0xff]
    %v107 = vld [vmem:[#allocation2 + $0x270] sm:$0xff]
    %v108 = vld [vmem:[#allocation2 + $0x278] sm:$0xff]
    %v109 = vld [vmem:[#allocation2 + $0x280] sm:$0xff]
    %v110 = vld [vmem:[#allocation2 + $0x288] sm:$0xff]
    %v111 = vld [vmem:[#allocation2 + $0x290] sm:$0xff]
    %v112 = vld [vmem:[#allocation2 + $0x298] sm:$0xff]
    %v113 = vld [vmem:[#allocation2 + $0x2a0] sm:$0xff]
    %v114 = vld [vmem:[#allocation2 + $0x2a8] sm:$0xff]
    %v115 = vld [vmem:[#allocation2 + $0x2b0] sm:$0xff]
    %v116 = vld [vmem:[#allocation2 + $0x2b8] sm:$0xff]
    %v117 = vld [vmem:[#allocation2 + $0x2c0] sm:$0xff]
    %v118 = vld [vmem:[#allocation2 + $0x2c8] sm:$0xff]
    %v119 = vld [vmem:[#allocation2 + $0x2d0] sm:$0xff]
    %v120 = vld [vmem:[#allocation2 + $0x2d8] sm:$0xff]
    %v121 = vld [vmem:[#allocation2 + $0x2e0] sm:$0xff]
    %v122 = vld [vmem:[#allocation2 + $0x2e8] sm:$0xff]
    %v123 = vld [vmem:[#allocation2 + $0x2f0] sm:$0xff]
    %v124 = vld [vmem:[#allocation2 + $0x2f8] sm:$0xff]
    %v125 = vld [vmem:[#allocation2 + $0x300] sm:$0xff]
    %v126 = vld [vmem:[#allocation2 + $0x308] sm:$0xff]
    %v127 = vld [vmem:[#allocation2 + $0x310] sm:$0xff]
    %v128 = vld [vmem:[#allocation2 + $0x318] sm:$0xff]
    %v129 = vld [vmem:[#allocation2 + $0x320] sm:$0xff]
    %v130 = vld [vmem:[#allocation2 + $0x328] sm:$0xff]
    %v131 = vld [vmem:[#allocation2 + $0x330] sm:$0xff]
    %v132 = vld [vmem:[#allocation2 + $0x338] sm:$0xff]
    %v133 = vld [vmem:[#allocation2 + $0x340] sm:$0xff]
    %v134 = vld [vmem:[#allocation2 + $0x348] sm:$0xff]
    %v135 = vld [vmem:[#allocation2 + $0x350] sm:$0xff]
    %v136 = vld [vmem:[#allocation2 + $0x358] sm:$0xff]
    %v137 = vld [vmem:[#allocation2 + $0x360] sm:$0xff]
    %v138 = vld [vmem:[#allocation2 + $0x368] sm:$0xff]
    %v139 = vld [vmem:[#allocation2 + $0x370] sm:$0xff]
    %v140 = vld [vmem:[#allocation2 + $0x378] sm:$0xff]
    %v141 = vld [vmem:[#allocation2 + $0x380] sm:$0xff]
    %v142 = vld [vmem:[#allocation2 + $0x388] sm:$0xff]
    %v143 = vld [vmem:[#allocation2 + $0x390] sm:$0xff]
    %v144 = vld [vmem:[#allocation2 + $0x398] sm:$0xff]
    %v145 = vld [vmem:[#allocation2 + $0x3a0] sm:$0xff]
    %v146 = vld [vmem:[#allocation2 + $0x3a8] sm:$0xff]
    %v147 = vld [vmem:[#allocation2 + $0x3b0] sm:$0xff]
    %v148 = vld [vmem:[#allocation2 + $0x3b8] sm:$0xff]
    %v149 = vld [vmem:[#allocation2 + $0x3c0] sm:$0xff]
    %v150 = vld [vmem:[#allocation2 + $0x3c8] sm:$0xff]
    %v151 = vld [vmem:[#allocation2 + $0x3d0] sm:$0xff]
    %v152 = vld [vmem:[#allocation2 + $0x3d8] sm:$0xff]
    %v153 = vld [vmem:[#allocation2 + $0x3e0] sm:$0xff]
    %v154 = vld [vmem:[#allocation2 + $0x3e8] sm:$0xff]
    %v155 = vld [vmem:[#allocation2 + $0x3f0] sm:$0xff]
    %v156 = vld [vmem:[#allocation2 + $0x3f8] sm:$0xff]
    %v157 = vld [vmem:[%s2] sm:$0xff]
    %v159 = vlaneseq
    %v160 = vshrl.u32 %v159, 7
    %v161 = vsub.s32 0, %v160
    %v162 = vrot.slane %v157, %v161
    %v163 = vlaneseq
    %v164 = vshrl.u32 %v163, 7
    %v165 = vsub.s32 1, %v164
    %v166 = vrot.slane %v157, %v165
    %v167 = vlaneseq
    %v168 = vshrl.u32 %v167, 7
    %v169 = vsub.s32 2, %v168
    %v170 = vrot.slane %v157, %v169
    %v171 = vlaneseq
    %v172 = vshrl.u32 %v171, 7
    %v173 = vsub.s32 3, %v172
    %v174 = vrot.slane %v157, %v173
    %v175 = vlaneseq
    %v176 = vshrl.u32 %v175, 7
    %v177 = vsub.s32 4, %v176
    %v178 = vrot.slane %v157, %v177
    %v179 = vlaneseq
    %v180 = vshrl.u32 %v179, 7
    %v181 = vsub.s32 5, %v180
    %v182 = vrot.slane %v157, %v181
    %v183 = vlaneseq
    %v184 = vshrl.u32 %v183, 7
    %v185 = vsub.s32 6, %v184
    %v186 = vrot.slane %v157, %v185
    %v187 = vlaneseq
    %v188 = vshrl.u32 %v187, 7
    %v189 = vsub.s32 7, %v188
    %v190 = vrot.slane %v157, %v189
    %199 = vmatprep.subr.mxu0 %v30
    %200 = vmatpush1.msra.mxu0 %v29
    %201 = vmatprep.subr.mxu0 %v38
    %202 = vmatpush1.msra.mxu0 %v37
    %203 = vmatprep.subr.mxu0 %v46
    %204 = vmatpush1.msra.mxu0 %v45
    %205 = vmatprep.subr.mxu0 %v54
    %206 = vmatpush1.msra.mxu0 %v53
    %207 = vmatprep.subr.mxu0 %v62
    %208 = vmatpush1.msra.mxu0 %v61
    %209 = vmatprep.subr.mxu0 %v70
    %210 = vmatpush1.msra.mxu0 %v69
    %211 = vmatprep.subr.mxu0 %v78
    %212 = vmatpush1.msra.mxu0 %v77
    %213 = vmatprep.subr.mxu0 %v86
    %214 = vmatpush1.msra.mxu0 %v85
    %215 = vmatprep.subr.mxu0 %v94
    %216 = vmatpush1.msra.mxu0 %v93
    %217 = vmatprep.subr.mxu0 %v102
    %218 = vmatpush1.msra.mxu0 %v101
    %219 = vmatprep.subr.mxu0 %v110
    %220 = vmatpush1.msra.mxu0 %v109
    %221 = vmatprep.subr.mxu0 %v118
    %222 = vmatpush1.msra.mxu0 %v117
    %223 = vmatprep.subr.mxu0 %v126
    %224 = vmatpush1.msra.mxu0 %v125
    %225 = vmatprep.subr.mxu0 %v134
    %226 = vmatpush1.msra.mxu0 %v133
    %227 = vmatprep.subr.mxu0 %v142
    %228 = vmatpush1.msra.mxu0 %v141
    %229 = vmatprep.subr.mxu0 %v150
    %230 = vmatpush1.msra.mxu0 %v149
    %231 = vmatprep.subr.mxu0 0.0
    %232 = vmatpush1.msra.mxu0 0.0
    %233 = vmatprep.subr.mxu0 0.0
    %234 = vmatpush1.msra.mxu0 0.0
    %235 = vmatprep.subr.mxu0 0.0
    %236 = vmatpush1.msra.mxu0 0.0
    %237 = vmatprep.subr.mxu0 0.0
    %238 = vmatpush1.msra.mxu0 0.0
    %239 = vmatprep.subr.mxu0 0.0
    %240 = vmatpush1.msra.mxu0 0.0
    %241 = vmatprep.subr.mxu0 0.0
    %242 = vmatpush1.msra.mxu0 0.0
    %243 = vmatprep.subr.mxu0 0.0
    %244 = vmatpush1.msra.mxu0 0.0
    %245 = vmatprep.subr.mxu0 0.0
    %246 = vmatpush1.msra.mxu0 0.0
    %247 = vmatprep.subr.mxu0 0.0
    %248 = vmatpush1.msra.mxu0 0.0
    %249 = vmatprep.subr.mxu0 0.0
    %250 = vmatpush1.msra.mxu0 0.0
    %251 = vmatprep.subr.mxu0 0.0
    %252 = vmatpush1.msra.mxu0 0.0
    %253 = vmatprep.subr.mxu0 0.0
    %254 = vmatpush1.msra.mxu0 0.0
    %255 = vmatprep.subr.mxu0 0.0
    %256 = vmatpush1.msra.mxu0 0.0
    %257 = vmatprep.subr.mxu0 0.0
    %258 = vmatpush1.msra.mxu0 0.0
    %259 = vmatprep.subr.mxu0 0.0
    %260 = vmatpush1.msra.mxu0 0.0
    %261 = vmatprep.subr.mxu0 0.0
    %262 = vmatpush1.msra.mxu0 0.0
    %263 = vmatprep.mubr.f32.mxu0 0.0
    %264 = vmatmul.mubr.f32.gmra.mrb[0].mxu0 %v28
    %v265 = vpop.f32.mrb[0].mxu0
    %v266 = vadd.f32 %v162, %v265
    %v267 = vpop.f32.mrb[0].mxu0
    %v268 = vadd.f32 %v166, %v267
    %269 = vdwg.mxu0
    %270 = vmatprep.subr.mxu0 %v32
    %271 = vmatpush1.msra.mxu0 %v31
    %272 = vmatprep.subr.mxu0 %v40
    %273 = vmatpush1.msra.mxu0 %v39
    %274 = vmatprep.subr.mxu0 %v48
    %275 = vmatpush1.msra.mxu0 %v47
    %276 = vmatprep.subr.mxu0 %v56
    %277 = vmatpush1.msra.mxu0 %v55
    %278 = vmatprep.subr.mxu0 %v64
    %279 = vmatpush1.msra.mxu0 %v63
    %280 = vmatprep.subr.mxu0 %v72
    %281 = vmatpush1.msra.mxu0 %v71
    %282 = vmatprep.subr.mxu0 %v80
    %283 = vmatpush1.msra.mxu0 %v79
    %284 = vmatprep.subr.mxu0 %v88
    %285 = vmatpush1.msra.mxu0 %v87
    %286 = vmatprep.subr.mxu0 %v96
    %287 = vmatpush1.msra.mxu0 %v95
    %288 = vmatprep.subr.mxu0 %v104
    %289 = vmatpush1.msra.mxu0 %v103
    %290 = vmatprep.subr.mxu0 %v112
    %291 = vmatpush1.msra.mxu0 %v111
    %292 = vmatprep.subr.mxu0 %v120
    %293 = vmatpush1.msra.mxu0 %v119
    %294 = vmatprep.subr.mxu0 %v128
    %295 = vmatpush1.msra.mxu0 %v127
    %296 = vmatprep.subr.mxu0 %v136
    %297 = vmatpush1.msra.mxu0 %v135
    %298 = vmatprep.subr.mxu0 %v144
    %299 = vmatpush1.msra.mxu0 %v143
    %300 = vmatprep.subr.mxu0 %v152
    %301 = vmatpush1.msra.mxu0 %v151
    %302 = vmatprep.subr.mxu0 0.0
    %303 = vmatpush1.msra.mxu0 0.0
    %304 = vmatprep.subr.mxu0 0.0
    %305 = vmatpush1.msra.mxu0 0.0
    %306 = vmatprep.subr.mxu0 0.0
    %307 = vmatpush1.msra.mxu0 0.0
    %308 = vmatprep.subr.mxu0 0.0
    %309 = vmatpush1.msra.mxu0 0.0
    %310 = vmatprep.subr.mxu0 0.0
    %311 = vmatpush1.msra.mxu0 0.0
    %312 = vmatprep.subr.mxu0 0.0
    %313 = vmatpush1.msra.mxu0 0.0
    %314 = vmatprep.subr.mxu0 0.0
    %315 = vmatpush1.msra.mxu0 0.0
    %316 = vmatprep.subr.mxu0 0.0
    %317 = vmatpush1.msra.mxu0 0.0
    %318 = vmatprep.subr.mxu0 0.0
    %319 = vmatpush1.msra.mxu0 0.0
    %320 = vmatprep.subr.mxu0 0.0
    %321 = vmatpush1.msra.mxu0 0.0
    %322 = vmatprep.subr.mxu0 0.0
    %323 = vmatpush1.msra.mxu0 0.0
    %324 = vmatprep.subr.mxu0 0.0
    %325 = vmatpush1.msra.mxu0 0.0
    %326 = vmatprep.subr.mxu0 0.0
    %327 = vmatpush1.msra.mxu0 0.0
    %328 = vmatprep.subr.mxu0 0.0
    %329 = vmatpush1.msra.mxu0 0.0
    %330 = vmatprep.subr.mxu0 0.0
    %331 = vmatpush1.msra.mxu0 0.0
    %332 = vmatprep.subr.mxu0 0.0
    %333 = vmatpush1.msra.mxu0 0.0
    %334 = vmatprep.mubr.f32.mxu0 0.0
    %335 = vmatmul.mubr.f32.gmra.mrb[0].mxu0 %v28
    %v336 = vpop.f32.mrb[0].mxu0
    %v337 = vadd.f32 %v170, %v336
    %v338 = vpop.f32.mrb[0].mxu0
    %v339 = vadd.f32 %v174, %v338
    %340 = vdwg.mxu0
    %341 = vmatprep.subr.mxu0 %v34
    %342 = vmatpush1.msra.mxu0 %v33
    %343 = vmatprep.subr.mxu0 %v42
    %344 = vmatpush1.msra.mxu0 %v41
    %345 = vmatprep.subr.mxu0 %v50
    %346 = vmatpush1.msra.mxu0 %v49
    %347 = vmatprep.subr.mxu0 %v58
    %348 = vmatpush1.msra.mxu0 %v57
    %349 = vmatprep.subr.mxu0 %v66
    %350 = vmatpush1.msra.mxu0 %v65
    %351 = vmatprep.subr.mxu0 %v74
    %352 = vmatpush1.msra.mxu0 %v73
    %353 = vmatprep.subr.mxu0 %v82
    %354 = vmatpush1.msra.mxu0 %v81
    %355 = vmatprep.subr.mxu0 %v90
    %356 = vmatpush1.msra.mxu0 %v89
    %357 = vmatprep.subr.mxu0 %v98
    %358 = vmatpush1.msra.mxu0 %v97
    %359 = vmatprep.subr.mxu0 %v106
    %360 = vmatpush1.msra.mxu0 %v105
    %361 = vmatprep.subr.mxu0 %v114
    %362 = vmatpush1.msra.mxu0 %v113
    %363 = vmatprep.subr.mxu0 %v122
    %364 = vmatpush1.msra.mxu0 %v121
    %365 = vmatprep.subr.mxu0 %v130
    %366 = vmatpush1.msra.mxu0 %v129
    %367 = vmatprep.subr.mxu0 %v138
    %368 = vmatpush1.msra.mxu0 %v137
    %369 = vmatprep.subr.mxu0 %v146
    %370 = vmatpush1.msra.mxu0 %v145
    %371 = vmatprep.subr.mxu0 %v154
    %372 = vmatpush1.msra.mxu0 %v153
    %373 = vmatprep.subr.mxu0 0.0
    %374 = vmatpush1.msra.mxu0 0.0
    %375 = vmatprep.subr.mxu0 0.0
    %376 = vmatpush1.msra.mxu0 0.0
    %377 = vmatprep.subr.mxu0 0.0
    %378 = vmatpush1.msra.mxu0 0.0
    %379 = vmatprep.subr.mxu0 0.0
    %380 = vmatpush1.msra.mxu0 0.0
    %381 = vmatprep.subr.mxu0 0.0
    %382 = vmatpush1.msra.mxu0 0.0
    %383 = vmatprep.subr.mxu0 0.0
    %384 = vmatpush1.msra.mxu0 0.0
    %385 = vmatprep.subr.mxu0 0.0
    %386 = vmatpush1.msra.mxu0 0.0
    %387 = vmatprep.subr.mxu0 0.0
    %388 = vmatpush1.msra.mxu0 0.0
    %389 = vmatprep.subr.mxu0 0.0
    %390 = vmatpush1.msra.mxu0 0.0
    %391 = vmatprep.subr.mxu0 0.0
    %392 = vmatpush1.msra.mxu0 0.0
    %393 = vmatprep.subr.mxu0 0.0
    %394 = vmatpush1.msra.mxu0 0.0
    %395 = vmatprep.subr.mxu0 0.0
    %396 = vmatpush1.msra.mxu0 0.0
    %397 = vmatprep.subr.mxu0 0.0
    %398 = vmatpush1.msra.mxu0 0.0
    %399 = vmatprep.subr.mxu0 0.0
    %400 = vmatpush1.msra.mxu0 0.0
    %401 = vmatprep.subr.mxu0 0.0
    %402 = vmatpush1.msra.mxu0 0.0
    %403 = vmatprep.subr.mxu0 0.0
    %404 = vmatpush1.msra.mxu0 0.0
    %405 = vmatprep.mubr.f32.mxu0 0.0
    %406 = vmatmul.mubr.f32.gmra.mrb[0].mxu0 %v28
    %v407 = vpop.f32.mrb[0].mxu0
    %v408 = vadd.f32 %v178, %v407
    %v409 = vpop.f32.mrb[0].mxu0
    %v410 = vadd.f32 %v182, %v409
    %411 = vdwg.mxu0
    %412 = vmatprep.subr.mxu0 %v36
    %413 = vmatpush1.msra.mxu0 %v35
    %414 = vmatprep.subr.mxu0 %v44
    %415 = vmatpush1.msra.mxu0 %v43
    %416 = vmatprep.subr.mxu0 %v52
    %417 = vmatpush1.msra.mxu0 %v51
    %418 = vmatprep.subr.mxu0 %v60
    %419 = vmatpush1.msra.mxu0 %v59
    %420 = vmatprep.subr.mxu0 %v68
    %421 = vmatpush1.msra.mxu0 %v67
    %422 = vmatprep.subr.mxu0 %v76
    %423 = vmatpush1.msra.mxu0 %v75
    %424 = vmatprep.subr.mxu0 %v84
    %425 = vmatpush1.msra.mxu0 %v83
    %426 = vmatprep.subr.mxu0 %v92
    %427 = vmatpush1.msra.mxu0 %v91
    %428 = vmatprep.subr.mxu0 %v100
    %429 = vmatpush1.msra.mxu0 %v99
    %430 = vmatprep.subr.mxu0 %v108
    %431 = vmatpush1.msra.mxu0 %v107
    %432 = vmatprep.subr.mxu0 %v116
    %433 = vmatpush1.msra.mxu0 %v115
    %434 = vmatprep.subr.mxu0 %v124
    %435 = vmatpush1.msra.mxu0 %v123
    %436 = vmatprep.subr.mxu0 %v132
    %437 = vmatpush1.msra.mxu0 %v131
    %438 = vmatprep.subr.mxu0 %v140
    %439 = vmatpush1.msra.mxu0 %v139
    %440 = vmatprep.subr.mxu0 %v148
    %441 = vmatpush1.msra.mxu0 %v147
    %442 = vmatprep.subr.mxu0 %v156
    %443 = vmatpush1.msra.mxu0 %v155
    %444 = vmatprep.subr.mxu0 0.0
    %445 = vmatpush1.msra.mxu0 0.0
    %446 = vmatprep.subr.mxu0 0.0
    %447 = vmatpush1.msra.mxu0 0.0
    %448 = vmatprep.subr.mxu0 0.0
    %449 = vmatpush1.msra.mxu0 0.0
    %450 = vmatprep.subr.mxu0 0.0
    %451 = vmatpush1.msra.mxu0 0.0
    %452 = vmatprep.subr.mxu0 0.0
    %453 = vmatpush1.msra.mxu0 0.0
    %454 = vmatprep.subr.mxu0 0.0
    %455 = vmatpush1.msra.mxu0 0.0
    %456 = vmatprep.subr.mxu0 0.0
    %457 = vmatpush1.msra.mxu0 0.0
    %458 = vmatprep.subr.mxu0 0.0
    %459 = vmatpush1.msra.mxu0 0.0
    %460 = vmatprep.subr.mxu0 0.0
    %461 = vmatpush1.msra.mxu0 0.0
    %462 = vmatprep.subr.mxu0 0.0
    %463 = vmatpush1.msra.mxu0 0.0
    %464 = vmatprep.subr.mxu0 0.0
    %465 = vmatpush1.msra.mxu0 0.0
    %466 = vmatprep.subr.mxu0 0.0
    %467 = vmatpush1.msra.mxu0 0.0
    %468 = vmatprep.subr.mxu0 0.0
    %469 = vmatpush1.msra.mxu0 0.0
    %470 = vmatprep.subr.mxu0 0.0
    %471 = vmatpush1.msra.mxu0 0.0
    %472 = vmatprep.subr.mxu0 0.0
    %473 = vmatpush1.msra.mxu0 0.0
    %474 = vmatprep.subr.mxu0 0.0
    %475 = vmatpush1.msra.mxu0 0.0
    %476 = vmatprep.mubr.f32.mxu0 0.0
    %477 = vmatmul.mubr.f32.gmra.mrb[0].mxu0 %v28
    %v478 = vpop.f32.mrb[0].mxu0
    %v479 = vadd.f32 %v186, %v478
    %v480 = vpop.f32.mrb[0].mxu0
    %v481 = vadd.f32 %v190, %v480
    %482 = vdwg.mxu0
    %483 = vst [vmem:[%s3] sm:$0xff] %v266
    %484 = vst [vmem:[%s3 + $0x8] sm:$0xff] %v268
    %485 = vst [vmem:[%s3 + $0x10] sm:$0xff] %v337
    %486 = vst [vmem:[%s3 + $0x18] sm:$0xff] %v339
    %487 = vst [vmem:[%s3 + $0x20] sm:$0xff] %v408
    %488 = vst [vmem:[%s3 + $0x28] sm:$0xff] %v410
    %489 = vst [vmem:[%s3 + $0x30] sm:$0xff] %v479
    %490 = vst [vmem:[%s3 + $0x38] sm:$0xff] %v481
    // Predicated region
    $region18: #{_planar_linear_pallas.1} parent=1 // pred_check
      _
    $region19: #{_planar_linear_pallas.1} parent=1 // pred_check_branch
      %492 = sbr.rel (0) target = $region21
    $region20: #{_planar_linear_pallas.1} parent=1 // pred_region
      _
    $region21: #{_planar_linear_pallas.1} parent=1 // pred_fallthru
      _
    // Predicated region
    $region22: #{_planar_linear_pallas.1} parent=1 // pred_check
      _
    $region23: #{_planar_linear_pallas.1} parent=1 // pred_check_branch
      %494 = sbr.rel (0) target = $region25
    $region24: #{_planar_linear_pallas.1} parent=1 // pred_region
      _
    $region25: #{_planar_linear_pallas.1} parent=1 // pred_fallthru
      _
    %495 = vsyncpa [#allocation3], 1

</llo_original>
